<compile_context>
chip_gen: v7x
topology: tpu7x:2x2x1
jax: 0.10.0
libtpu: 0.0.40
codegen_flags: <defaults>
</compile_context>

<pallas_src>
import functools

import jax
import jax.numpy as jnp
from jax.experimental import pallas as pl
from jax.experimental.pallas import tpu as pltpu


def _round_up(x: int, m: int) -> int:
    return (x + m - 1) // m * m


def _vq_argmin_kernel(zt_ref, e_ref, half_esq_ref, idx_ref):
    """One row-tile of the nearest-codebook search.

    zt_ref:       (C, tn)    latents, one column per spatial position
    e_ref:        (K, C)     full codebook (VMEM-resident across the grid)
    half_esq_ref: (K, 1)     precomputed 0.5*||e_k||^2 (f32)
    idx_ref:      (1, tn)    int32 argmin indices (lane-dense output)
    """
    zt = zt_ref[...]                                    # (C, tn), native dtype
    e = e_ref[...]                                      # (K, C),  native dtype

    # scores[k, n] = e_k . z_n  — plain (K,C) @ (C,tn) MXU matmul, no transposes.
    scores = jnp.dot(e, zt, preferred_element_type=jnp.float32)    # (K, tn) f32

    # d' = 0.5*||e||^2 - e.z : same argmin as |z - e|^2 (||z||^2 dropped).
    d = half_esq_ref[...] - scores                                  # (K, tn)

    kdim = d.shape[0]
    dmin = jnp.min(d, axis=0, keepdims=True)                        # (1, tn)
    row = jax.lax.broadcasted_iota(jnp.int32, d.shape, 0)           # (K, tn)
    # First-minimum tie-break (matches torch.argmin / jnp.argmin).
    arg = jnp.min(jnp.where(d == dmin, row, kdim), axis=0, keepdims=True)
    idx_ref[...] = arg.astype(jnp.int32)                            # (1, tn)


def vq_nearest_indices(z_flat_t, codebook, *, tn=256):
    """Nearest codebook row index for each column of z_flat_t ((C, N) layout)."""
    C, N = z_flat_t.shape
    K, C2 = codebook.shape
    assert C == C2, "latent_dim mismatch between z and codebook"

    # Row-tile width: multiple of 128 (lane-dense output), capped by N.
    tn = min(tn, _round_up(max(N, 1), 128))
    N_pad = _round_up(N, tn)
    K_pad = _round_up(K, 8)

    # Hoisted once: 0.5*||e_k||^2 (f32), shape (K, 1).
    half_esq = 0.5 * jnp.sum(
        codebook.astype(jnp.float32) ** 2, axis=1, keepdims=True)

    if K_pad != K:
        codebook = jnp.pad(codebook, ((0, K_pad - K), (0, 0)))
        half_esq = jnp.pad(half_esq, ((0, K_pad - K), (0, 0)),
                           constant_values=jnp.float32(1e30))  # never the min
    if N_pad != N:
        z_flat_t = jnp.pad(z_flat_t, ((0, 0), (0, N_pad - N)))

    idx = pl.pallas_call(
        _vq_argmin_kernel,
        out_shape=jax.ShapeDtypeStruct((1, N_pad), jnp.int32),
        grid=(N_pad // tn,),
        in_specs=[
            pl.BlockSpec((C, tn), lambda i: (0, i)),       # streamed latents
            pl.BlockSpec((K_pad, C), lambda i: (0, 0)),    # codebook: resident
            pl.BlockSpec((K_pad, 1), lambda i: (0, 0)),    # 0.5*||e||^2: resident
        ],
        out_specs=pl.BlockSpec((1, tn), lambda i: (0, i)),
        compiler_params=pltpu.CompilerParams(
            dimension_semantics=("parallel",)),
    )(z_flat_t, codebook, half_esq)
    return idx[0, :N]


@functools.partial(jax.jit, static_argnames=("commitment_weight",))
def vector_quantizer_forward(z, codebook, commitment_weight=0.25):
    """Mirrors VectorQuantizer.forward.  z is NCHW with C == latent_dim."""
    b, c, h, w = z.shape
    # 'b c h w -> c (b h w)' : columns are (b, h, w)-major, matching the
    # reference row order of rearrange(z, 'b c h w -> (b h w) c').
    z_flat_t = jnp.transpose(z, (1, 0, 2, 3)).reshape(c, b * h * w)

    # Hot path: distance matmul + argmin in the Pallas kernel.
    flat_idx = vq_nearest_indices(z_flat_t, codebook)
    indices = flat_idx.reshape(b, h * w)

    # Embedding gather + rearrange 'b (h w) c -> b c h w'  (cheap glue).
    z_q_flat = jnp.take(codebook, flat_idx, axis=0)                 # (N, C)
    z_q = jnp.transpose(z_q_flat.reshape(b, h, w, c), (0, 3, 1, 2))

    codebook_loss = (jnp.mean((z_q - jax.lax.stop_gradient(z)) ** 2)
                     + commitment_weight
                     * jnp.mean((jax.lax.stop_gradient(z_q) - z) ** 2))

    quantized = z + jax.lax.stop_gradient(z_q - z)   # straight-through estimator
    return quantized, indices, codebook_loss


def _reference_forward(z, codebook, commitment_weight=0.25):
    """Pure-JAX reference matching the PyTorch module exactly."""
    b, c, h, w = z.shape
    zf = jnp.transpose(z, (0, 2, 3, 1)).reshape(b * h * w, c)
    d = (jnp.sum(zf ** 2, axis=1, keepdims=True)
         + jnp.sum(codebook ** 2, axis=1)
         - 2.0 * zf @ codebook.T)
    idx = jnp.argmin(d, axis=1).astype(jnp.int32)
    indices = idx.reshape(b, h * w)
    z_q = jnp.transpose(jnp.take(codebook, idx, axis=0).reshape(b, h, w, c),
                        (0, 3, 1, 2))
    loss = (jnp.mean((z_q - jax.lax.stop_gradient(z)) ** 2)
            + commitment_weight
            * jnp.mean((jax.lax.stop_gradient(z_q) - z) ** 2))
    quantized = z + jax.lax.stop_gradient(z_q - z)
    return quantized, indices, loss


if __name__ == "__main__":
    # Small, TPU-friendly shapes consistent with the module:
    # codebook_size=256, latent_dim=32, batch=2, spatial 8x8.
    codebook_size = 256
    latent_dim = 32
    b, h, w = 2, 8, 8

    key = jax.random.PRNGKey(0)
    k_cb, k_z = jax.random.split(key)

    # nn.Embedding weight init: uniform(-1/codebook_size, 1/codebook_size)
    codebook = jax.random.uniform(
        k_cb, (codebook_size, latent_dim), dtype=jnp.float32,
        minval=-1.0 / codebook_size, maxval=1.0 / codebook_size)
    z = jax.random.normal(k_z, (b, latent_dim, h, w), dtype=jnp.float32)

    quantized, indices, loss = vector_quantizer_forward(z, codebook)
    quantized = jax.block_until_ready(quantized)
    indices = jax.block_until_ready(indices)
    loss = jax.block_until_ready(loss)

    # Sanity check against a pure-JAX reference of the PyTorch forward.
    q_ref, idx_ref, loss_ref = _reference_forward(z, codebook)
    assert jnp.array_equal(indices, idx_ref), "argmin indices mismatch"
    assert jnp.allclose(quantized, q_ref, atol=1e-5), "quantized mismatch"
    assert jnp.allclose(loss, loss_ref, atol=1e-6), "loss mismatch"

    print("KERNEL_OK")
</pallas_src>

<mosaic_0001>
module attributes {stable_mosaic.version = 11 : i64} {
  func.func @_vq_argmin_kernel(%arg0: i32, %arg1: memref<32x128xf32, #tpu.memory_space<vmem>>, %arg2: memref<256x32xf32, #tpu.memory_space<vmem>>, %arg3: memref<256x1xf32, #tpu.memory_space<vmem>>, %arg4: memref<1x128xi32, #tpu.memory_space<vmem>>) attributes {dimension_semantics = [#tpu.dimension_semantics<parallel>], iteration_bounds = array<i64: 1>, scalar_prefetch = 0 : i64, scratch_operands = 0 : i64, tpu.core_type = #tpu.core_type<tc>, window_params = [{transform_indices = @transform_0, window_bounds = array<i64: 32, 128>}, {pipeline_mode = #tpu.pipeline_mode<synchronous>, transform_indices = @transform_1, window_bounds = array<i64: 256, 32>}, {pipeline_mode = #tpu.pipeline_mode<synchronous>, transform_indices = @transform_2, window_bounds = array<i64: 256, 1>}, {transform_indices = @transform_3, window_bounds = array<i64: 1, 128>}]} {
    %c0 = arith.constant 0 : index
    %c0_0 = arith.constant 0 : index
    %0 = vector.load %arg1[%c0, %c0_0] : memref<32x128xf32, #tpu.memory_space<vmem>>, vector<32x128xf32>
    %c0_1 = arith.constant 0 : index
    %c0_2 = arith.constant 0 : index
    %1 = vector.load %arg2[%c0_1, %c0_2] : memref<256x32xf32, #tpu.memory_space<vmem>>, vector<256x32xf32>
    %cst = arith.constant dense<0.000000e+00> : vector<256x128xf32>
    %2 = tpu.matmul %1, %0, %cst {dimension_numbers = #tpu.dot_dimension_numbers<[1], [0], [0], [1], [0, 0, 1, 1], [], []>} : vector<256x32xf32>, vector<32x128xf32>, vector<256x128xf32> -> vector<256x128xf32>
    %c0_3 = arith.constant 0 : index
    %c0_4 = arith.constant 0 : index
    %3 = vector.load %arg3[%c0_3, %c0_4] : memref<256x1xf32, #tpu.memory_space<vmem>>, vector<256x1xf32>
    %4 = vector.broadcast %3 : vector<256x1xf32> to vector<256x128xf32>
    %5 = arith.subf %4, %2 : vector<256x128xf32>
    %cst_5 = arith.constant dense<0x7F800000> : vector<128xf32>
    %6 = vector.multi_reduction <minimumf>, %5, %cst_5 [0] : vector<256x128xf32> to vector<128xf32>
    %7 = vector.shape_cast %6 : vector<128xf32> to vector<1x128xf32>
    %8 = tpu.iota {dimensions = array<i32: 0>} : vector<256x128xi32>
    %9 = vector.broadcast %7 : vector<1x128xf32> to vector<256x128xf32>
    %10 = arith.cmpf oeq, %5, %9 : vector<256x128xf32>
    %c256_i32 = arith.constant 256 : i32
    %11 = vector.broadcast %c256_i32 : i32 to vector<256x128xi32>
    %12 = arith.select %10, %8, %11 : vector<256x128xi1>, vector<256x128xi32>
    %cst_6 = arith.constant dense<2147483647> : vector<128xi32>
    %13 = vector.multi_reduction <minsi>, %12, %cst_6 [0] : vector<256x128xi32> to vector<128xi32>
    %14 = vector.shape_cast %13 : vector<128xi32> to vector<1x128xi32>
    %c0_7 = arith.constant 0 : index
    %c0_8 = arith.constant 0 : index
    %15 = vector.load %arg4[%c0_7, %c0_8] : memref<1x128xi32, #tpu.memory_space<vmem>>, vector<1x128xi32>
    tpu.vector_store %arg4[%c0_7, %c0_8], %14 {strides = array<i32>} : memref<1x128xi32, #tpu.memory_space<vmem>>, vector<1x128xi32>,
    return
  }
  func.func @transform_0(%arg0: i32) -> (i32, i32) {
    %c0_i32 = arith.constant 0 : i32
    %c0_i32_0 = arith.constant 0 : i32
    return %c0_i32, %arg0 : i32, i32
  }
  func.func @transform_1(%arg0: i32) -> (i32, i32) {
    %c0_i32 = arith.constant 0 : i32
    %c0_i32_0 = arith.constant 0 : i32
    %c0_i32_1 = arith.constant 0 : i32
    return %c0_i32, %c0_i32_0 : i32, i32
  }
  func.func @transform_2(%arg0: i32) -> (i32, i32) {
    %c0_i32 = arith.constant 0 : i32
    %c0_i32_0 = arith.constant 0 : i32
    %c0_i32_1 = arith.constant 0 : i32
    return %c0_i32, %c0_i32_0 : i32, i32
  }
  func.func @transform_3(%arg0: i32) -> (i32, i32) {
    %c0_i32 = arith.constant 0 : i32
    %c0_i32_0 = arith.constant 0 : i32
    return %c0_i32, %arg0 : i32, i32
  }
}

</mosaic_0001>

<llo_original>
// kernel: squeeze.3
$region0: #{squeeze.3}
  %s0 = inlined_call_operand.vmem [shape: s32[128], index: 0, kind: input, shape index: {}]
  %s1 = inlined_call_operand.hbm [shape: s32[2,64], index: 1, kind: output, shape index: {}]
  $region1: #{squeeze.3} parent=0
    #allocation0 [shape = 'u8[1024]{0}', space=vmem, size = 0x400, scoped, tag = 'operand span for operand 1']
    #allocation1 [shape = 's32[1]{0}', space=sflag, size = 0x4, scoped, tag = 'scoped memory for squeeze.3']
    #allocation2 [shape = 'u8[4096]{0}', space=vmem, size = 0x1000, scoped, tag = 'scoped mem for output reshape']
    #allocation3 [shape = 'u8[4096]{0}', space=vmem, size = 0x1000, scoped, tag = 'scoped mem for input reshape']
    %2 = vsyncpa [#allocation1], 0
    %s4 = sshllo.u32 0, 1
    %v5 = vld [vmem:[%s0] sm:%s4]
    %6 = vst [vmem:[#allocation3] sm:%s4] %v5
    %v7 = vld [vmem:[#allocation3] sm:$0x1]
    %vm8 = vcmask 523264
    %9 = vst.msk [vmem:[#allocation2] sm:$0x1] %vm8, %v7
    %v10 = vld [vmem:[#allocation3] sm:$0x1]
    %11 = vrot.lane.b32.xlu0 %v10, 64
    %v12 = vpop.permute.xlu0 %11
    %vm13 = vcmask 523264
    %s14 = scalar_lea.vmem [#allocation2], 1
    %15 = vst.msk [vmem:[%s14] sm:$0x1] %vm13, %v12
    %s17 = sshllo.u32 0, 2
    %v19 = vld [vmem:[#allocation2] sm:%s17]
    %s20 = sshllo.u32 0, 2
    %21 = vst [vmem:[#allocation0] sm:%s20] %v19
    %s23 = ssub.s32 32, 32
    %24 = vsyncadd [#allocation1], %s23
    %s26 = sshll.u32 [#allocation0], 4
    %s27 = int_to_ptr.vmem [resolvable:$true] %s26
    %29 = dma.vmem_to_hbm [thread:$0]  %s27, 32, %s1, [#allocation1]
    %30 = dma.done [#allocation1], 32
    %31 = vsyncpa [#allocation1], 1

// kernel: vector_quantizer_forward.1
$region0: #{vector_quantizer_forward.1}
  #allocation0 [shape = 'u32[]', space=smem, size = 0x4, offset = 0x4, fixed_abs, tag = 'smem constant byte address 0x4 - core index']
  #allocation1 [shape = 'u32[144,128]{1,0:T(1,128)}', space=vmem, size = 0x12000, scoped, tag = 'internal scratch']
  %s0 = inlined_call_operand.vmem [shape: f32[32,128], index: 0, kind: input, shape index: {}]
  %s1 = inlined_call_operand.vmem [shape: f32[256,32], index: 1, kind: input, shape index: {}]
  %s2 = inlined_call_operand.vmem [shape: f32[256,1], index: 2, kind: input, shape index: {}]
  %s3 = inlined_call_operand.vmem [shape: s32[1,128], index: 3, kind: output, shape index: {}]
  %s4 = sld [smem:[#allocation0]]
  $region22: #{vector_quantizer_forward.1} parent=0
    _
  %s6 = ssub.s32 1, %s4
  %s7 = scalar_select 0, %s6, %s4
  // Predicated region
  $region2: #{vector_quantizer_forward.1} parent=0 // pred_check
    _
  $region3: #{vector_quantizer_forward.1} parent=0 // pred_check_branch
    %9 = sbr.rel (0) target = $region5
  $region4: #{vector_quantizer_forward.1} parent=0 // pred_region
    _
  $region5: #{vector_quantizer_forward.1} parent=0 // pred_fallthru
    _
  // Predicated region
  $region6: #{vector_quantizer_forward.1} parent=0 // pred_check
    _
  $region7: #{vector_quantizer_forward.1} parent=0 // pred_check_branch
    %11 = sbr.rel (0) target = $region9
  $region8: #{vector_quantizer_forward.1} parent=0 // pred_region
    _
  $region9: #{vector_quantizer_forward.1} parent=0 // pred_fallthru
    _
  // Predicated region
  $region10: #{vector_quantizer_forward.1} parent=0 // pred_check
    _
  $region11: #{vector_quantizer_forward.1} parent=0 // pred_check_branch
    %13 = sbr.rel (0) target = $region13
  $region12: #{vector_quantizer_forward.1} parent=0 // pred_region
    _
  $region13: #{vector_quantizer_forward.1} parent=0 // pred_fallthru
    _
  %v14 = vld [vmem:[%s0] sm:$0xff]
  %v15 = vld [vmem:[%s0 + $0x8] sm:$0xff]
  %v16 = vld [vmem:[%s0 + $0x10] sm:$0xff]
  %v17 = vld [vmem:[%s0 + $0x18] sm:$0xff]
  %v18 = vld [vmem:[%s1] sm:$0xff]
  %v19 = vld [vmem:[%s1 + $0x8] sm:$0xff]
  %v20 = vld [vmem:[%s1 + $0x10] sm:$0xff]
  %v21 = vld [vmem:[%s1 + $0x18] sm:$0xff]
  %v22 = vld [vmem:[%s1 + $0x20] sm:$0xff]
  %v23 = vld [vmem:[%s1 + $0x28] sm:$0xff]
  %v24 = vld [vmem:[%s1 + $0x30] sm:$0xff]
  %v25 = vld [vmem:[%s1 + $0x38] sm:$0xff]
  %v26 = vld [vmem:[%s1 + $0x40] sm:$0xff]
  %v27 = vld [vmem:[%s1 + $0x48] sm:$0xff]
  %v28 = vld [vmem:[%s1 + $0x50] sm:$0xff]
  %v29 = vld [vmem:[%s1 + $0x58] sm:$0xff]
  %v30 = vld [vmem:[%s1 + $0x60] sm:$0xff]
  %v31 = vld [vmem:[%s1 + $0x68] sm:$0xff]
  %v32 = vld [vmem:[%s1 + $0x70] sm:$0xff]
  %v33 = vld [vmem:[%s1 + $0x78] sm:$0xff]
  %v34 = vld [vmem:[%s1 + $0x80] sm:$0xff]
  %v35 = vld [vmem:[%s1 + $0x88] sm:$0xff]
  %v36 = vld [vmem:[%s1 + $0x90] sm:$0xff]
  %v37 = vld [vmem:[%s1 + $0x98] sm:$0xff]
  %v38 = vld [vmem:[%s1 + $0xa0] sm:$0xff]
  %v39 = vld [vmem:[%s1 + $0xa8] sm:$0xff]
  %v40 = vld [vmem:[%s1 + $0xb0] sm:$0xff]
  %v41 = vld [vmem:[%s1 + $0xb8] sm:$0xff]
  %v42 = vld [vmem:[%s1 + $0xc0] sm:$0xff]
  %v43 = vld [vmem:[%s1 + $0xc8] sm:$0xff]
  %v44 = vld [vmem:[%s1 + $0xd0] sm:$0xff]
  %v45 = vld [vmem:[%s1 + $0xd8] sm:$0xff]
  %v46 = vld [vmem:[%s1 + $0xe0] sm:$0xff]
  %v47 = vld [vmem:[%s1 + $0xe8] sm:$0xff]
  %v48 = vld [vmem:[%s1 + $0xf0] sm:$0xff]
  %v49 = vld [vmem:[%s1 + $0xf8] sm:$0xff]
  %vm50 = vcmask 261120
  %v52 = vsel %vm50, %v18, 0
  %v55 = vsel %vm50, %v19, 0
  %v58 = vsel %vm50, %v20, 0
  %v61 = vsel %vm50, %v21, 0
  %v64 = vsel %vm50, %v22, 0
  %v67 = vsel %vm50, %v23, 0
  %v70 = vsel %vm50, %v24, 0
  %v73 = vsel %vm50, %v25, 0
  %v76 = vsel %vm50, %v26, 0
  %v79 = vsel %vm50, %v27, 0
  %v82 = vsel %vm50, %v28, 0
  %v85 = vsel %vm50, %v29, 0
  %v88 = vsel %vm50, %v30, 0
  %v91 = vsel %vm50, %v31, 0
  %v94 = vsel %vm50, %v32, 0
  %v97 = vsel %vm50, %v33, 0
  %v100 = vsel %vm50, %v34, 0
  %v103 = vsel %vm50, %v35, 0
  %v106 = vsel %vm50, %v36, 0
  %v109 = vsel %vm50, %v37, 0
  %v112 = vsel %vm50, %v38, 0
  %v115 = vsel %vm50, %v39, 0
  %v118 = vsel %vm50, %v40, 0
  %v121 = vsel %vm50, %v41, 0
  %v124 = vsel %vm50, %v42, 0
  %v127 = vsel %vm50, %v43, 0
  %v130 = vsel %vm50, %v44, 0
  %v133 = vsel %vm50, %v45, 0
  %v136 = vsel %vm50, %v46, 0
  %v139 = vsel %vm50, %v47, 0
  %v142 = vsel %vm50, %v48, 0
  %v145 = vsel %vm50, %v49, 0
  %147 = vmatprep.subr.mxu0 0.0
  %148 = vmatpush1.msra.mxu0 %v14
  %149 = vmatprep.subr.mxu0 0.0
  %150 = vmatpush1.msra.mxu0 %v15
  %151 = vmatprep.subr.mxu0 0.0
  %152 = vmatpush1.msra.mxu0 %v16
  %153 = vmatprep.subr.mxu0 0.0
  %154 = vmatpush1.msra.mxu0 %v17
  %155 = vmatprep.subr.mxu0 0.0
  %156 = vmatpush1.msra.mxu0 0.0
  %157 = vmatprep.subr.mxu0 0.0
  %158 = vmatpush1.msra.mxu0 0.0
  %159 = vmatprep.subr.mxu0 0.0
  %160 = vmatpush1.msra.mxu0 0.0
  %161 = vmatprep.subr.mxu0 0.0
  %162 = vmatpush1.msra.mxu0 0.0
  %163 = vmatprep.subr.mxu0 0.0
  %164 = vmatpush1.msra.mxu0 0.0
  %165 = vmatprep.subr.mxu0 0.0
  %166 = vmatpush1.msra.mxu0 0.0
  %167 = vmatprep.subr.mxu0 0.0
  %168 = vmatpush1.msra.mxu0 0.0
  %169 = vmatprep.subr.mxu0 0.0
  %170 = vmatpush1.msra.mxu0 0.0
  %171 = vmatprep.subr.mxu0 0.0
  %172 = vmatpush1.msra.mxu0 0.0
  %173 = vmatprep.subr.mxu0 0.0
  %174 = vmatpush1.msra.mxu0 0.0
  %175 = vmatprep.subr.mxu0 0.0
  %176 = vmatpush1.msra.mxu0 0.0
  %177 = vmatprep.subr.mxu0 0.0
  %178 = vmatpush1.msra.mxu0 0.0
  %179 = vmatprep.subr.mxu0 0.0
  %180 = vmatpush1.msra.mxu0 0.0
  %181 = vmatprep.subr.mxu0 0.0
  %182 = vmatpush1.msra.mxu0 0.0
  %183 = vmatprep.subr.mxu0 0.0
  %184 = vmatpush1.msra.mxu0 0.0
  %185 = vmatprep.subr.mxu0 0.0
  %186 = vmatpush1.msra.mxu0 0.0
  %187 = vmatprep.subr.mxu0 0.0
  %188 = vmatpush1.msra.mxu0 0.0
  %189 = vmatprep.subr.mxu0 0.0
  %190 = vmatpush1.msra.mxu0 0.0
  %191 = vmatprep.subr.mxu0 0.0
  %192 = vmatpush1.msra.mxu0 0.0
  %193 = vmatprep.subr.mxu0 0.0
  %194 = vmatpush1.msra.mxu0 0.0
  %195 = vmatprep.subr.mxu0 0.0
  %196 = vmatpush1.msra.mxu0 0.0
  %197 = vmatprep.subr.mxu0 0.0
  %198 = vmatpush1.msra.mxu0 0.0
  %199 = vmatprep.subr.mxu0 0.0
  %200 = vmatpush1.msra.mxu0 0.0
  %201 = vmatprep.subr.mxu0 0.0
  %202 = vmatpush1.msra.mxu0 0.0
  %203 = vmatprep.subr.mxu0 0.0
  %204 = vmatpush1.msra.mxu0 0.0
  %205 = vmatprep.subr.mxu0 0.0
  %206 = vmatpush1.msra.mxu0 0.0
  %207 = vmatprep.subr.mxu0 0.0
  %208 = vmatpush1.msra.mxu0 0.0
  %209 = vmatprep.subr.mxu0 0.0
  %210 = vmatpush1.msra.mxu0 0.0
  %211 = vmatprep.mubr.f32.mxu0 0.0
  %212 = vmatmul.mubr.f32.gmra.mrb[0].mxu0 %v52
  %v213 = vpop.f32.mrb[0].mxu0
  %v214 = vadd.f32 0.0, %v213
  %v215 = vpop.f32.mrb[0].mxu0
  %216 = vmatprep.mubr.f32.mxu0 0.0
  %217 = vmatmul.mubr.f32.gmra.mrb[0].mxu0 %v55
  %v218 = vpop.f32.mrb[0].mxu0
  %v219 = vadd.f32 0.0, %v218
  %v220 = vpop.f32.mrb[0].mxu0
  %221 = vmatprep.mubr.f32.mxu0 0.0
  %222 = vmatmul.mubr.f32.gmra.mrb[0].mxu0 %v58
  %v223 = vpop.f32.mrb[0].mxu0
  %v224 = vadd.f32 0.0, %v223
  %v225 = vpop.f32.mrb[0].mxu0
  %226 = vmatprep.mubr.f32.mxu0 0.0
  %227 = vmatmul.mubr.f32.gmra.mrb[0].mxu0 %v61
  %v228 = vpop.f32.mrb[0].mxu0
  %v229 = vadd.f32 0.0, %v228
  %v230 = vpop.f32.mrb[0].mxu0
  %231 = vmatprep.mubr.f32.mxu0 0.0
  %232 = vmatmul.mubr.f32.gmra.mrb[0].mxu0 %v64
  %v233 = vpop.f32.mrb[0].mxu0
  %v234 = vadd.f32 0.0, %v233
  %v235 = vpop.f32.mrb[0].mxu0
  %236 = vmatprep.mubr.f32.mxu0 0.0
  %237 = vmatmul.mubr.f32.gmra.mrb[0].mxu0 %v67
  %v238 = vpop.f32.mrb[0].mxu0
  %v239 = vadd.f32 0.0, %v238
  %v240 = vpop.f32.mrb[0].mxu0
  %241 = vmatprep.mubr.f32.mxu0 0.0
  %242 = vmatmul.mubr.f32.gmra.mrb[0].mxu0 %v70
  %v243 = vpop.f32.mrb[0].mxu0
  %v244 = vadd.f32 0.0, %v243
  %v245 = vpop.f32.mrb[0].mxu0
  %246 = vmatprep.mubr.f32.mxu0 0.0
  %247 = vmatmul.mubr.f32.gmra.mrb[0].mxu0 %v73
  %v248 = vpop.f32.mrb[0].mxu0
  %v249 = vadd.f32 0.0, %v248
  %v250 = vpop.f32.mrb[0].mxu0
  %251 = vmatprep.mubr.f32.mxu0 0.0
  %252 = vmatmul.mubr.f32.gmra.mrb[0].mxu0 %v76
  %v253 = vpop.f32.mrb[0].mxu0
  %v254 = vadd.f32 0.0, %v253
  %v255 = vpop.f32.mrb[0].mxu0
  %256 = vmatprep.mubr.f32.mxu0 0.0
  %257 = vmatmul.mubr.f32.gmra.mrb[0].mxu0 %v79
  %v258 = vpop.f32.mrb[0].mxu0
  %v259 = vadd.f32 0.0, %v258
  %v260 = vpop.f32.mrb[0].mxu0
  %261 = vmatprep.mubr.f32.mxu0 0.0
  %262 = vmatmul.mubr.f32.gmra.mrb[0].mxu0 %v82
  %v263 = vpop.f32.mrb[0].mxu0
  %v264 = vadd.f32 0.0, %v263
  %v265 = vpop.f32.mrb[0].mxu0
  %266 = vmatprep.mubr.f32.mxu0 0.0
  %267 = vmatmul.mubr.f32.gmra.mrb[0].mxu0 %v85
  %v268 = vpop.f32.mrb[0].mxu0
  %v269 = vadd.f32 0.0, %v268
  %v270 = vpop.f32.mrb[0].mxu0
  %271 = vmatprep.mubr.f32.mxu0 0.0
  %272 = vmatmul.mubr.f32.gmra.mrb[0].mxu0 %v88
  %v273 = vpop.f32.mrb[0].mxu0
  %v274 = vadd.f32 0.0, %v273
  %v275 = vpop.f32.mrb[0].mxu0
  %276 = vmatprep.mubr.f32.mxu0 0.0
  %277 = vmatmul.mubr.f32.gmra.mrb[0].mxu0 %v91
  %v278 = vpop.f32.mrb[0].mxu0
  %v279 = vadd.f32 0.0, %v278
  %v280 = vpop.f32.mrb[0].mxu0
  %281 = vmatprep.mubr.f32.mxu0 0.0
  %282 = vmatmul.mubr.f32.gmra.mrb[0].mxu0 %v94
  %v283 = vpop.f32.mrb[0].mxu0
  %v284 = vadd.f32 0.0, %v283
  %v285 = vpop.f32.mrb[0].mxu0
  %286 = vmatprep.mubr.f32.mxu0 0.0
  %287 = vmatmul.mubr.f32.gmra.mrb[0].mxu0 %v97
  %v288 = vpop.f32.mrb[0].mxu0
  %v289 = vadd.f32 0.0, %v288
  %v290 = vpop.f32.mrb[0].mxu0
  %291 = vmatprep.mubr.f32.mxu0 0.0
  %292 = vmatmul.mubr.f32.gmra.mrb[0].mxu0 %v100
  %v293 = vpop.f32.mrb[0].mxu0
  %v294 = vadd.f32 0.0, %v293
  %v295 = vpop.f32.mrb[0].mxu0
  %296 = vmatprep.mubr.f32.mxu0 0.0
  %297 = vmatmul.mubr.f32.gmra.mrb[0].mxu0 %v103
  %v298 = vpop.f32.mrb[0].mxu0
  %v299 = vadd.f32 0.0, %v298
  %v300 = vpop.f32.mrb[0].mxu0
  %301 = vmatprep.mubr.f32.mxu0 0.0
  %302 = vmatmul.mubr.f32.gmra.mrb[0].mxu0 %v106
  %v303 = vpop.f32.mrb[0].mxu0
  %v304 = vadd.f32 0.0, %v303
  %v305 = vpop.f32.mrb[0].mxu0
  %306 = vmatprep.mubr.f32.mxu0 0.0
  %307 = vmatmul.mubr.f32.gmra.mrb[0].mxu0 %v109
  %v308 = vpop.f32.mrb[0].mxu0
  %v309 = vadd.f32 0.0, %v308
  %v310 = vpop.f32.mrb[0].mxu0
  %311 = vmatprep.mubr.f32.mxu0 0.0
  %312 = vmatmul.mubr.f32.gmra.mrb[0].mxu0 %v112
  %v313 = vpop.f32.mrb[0].mxu0
  %v314 = vadd.f32 0.0, %v313
  %v315 = vpop.f32.mrb[0].mxu0
  %316 = vmatprep.mubr.f32.mxu0 0.0
  %317 = vmatmul.mubr.f32.gmra.mrb[0].mxu0 %v115
  %v318 = vpop.f32.mrb[0].mxu0
  %v319 = vadd.f32 0.0, %v318
  %v320 = vpop.f32.mrb[0].mxu0
  %321 = vmatprep.mubr.f32.mxu0 0.0
  %322 = vmatmul.mubr.f32.gmra.mrb[0].mxu0 %v118
  %v323 = vpop.f32.mrb[0].mxu0
  %v324 = vadd.f32 0.0, %v323
  %v325 = vpop.f32.mrb[0].mxu0
  %326 = vmatprep.mubr.f32.mxu0 0.0
  %327 = vmatmul.mubr.f32.gmra.mrb[0].mxu0 %v121
  %v328 = vpop.f32.mrb[0].mxu0
  %v329 = vadd.f32 0.0, %v328
  %v330 = vpop.f32.mrb[0].mxu0
  %331 = vmatprep.mubr.f32.mxu0 0.0
  %332 = vmatmul.mubr.f32.gmra.mrb[0].mxu0 %v124
  %v333 = vpop.f32.mrb[0].mxu0
  %v334 = vadd.f32 0.0, %v333
  %v335 = vpop.f32.mrb[0].mxu0
  %336 = vmatprep.mubr.f32.mxu0 0.0
  %337 = vmatmul.mubr.f32.gmra.mrb[0].mxu0 %v127
  %v338 = vpop.f32.mrb[0].mxu0
  %v339 = vadd.f32 0.0, %v338
  %v340 = vpop.f32.mrb[0].mxu0
  %341 = vmatprep.mubr.f32.mxu0 0.0
  %342 = vmatmul.mubr.f32.gmra.mrb[0].mxu0 %v130
  %v343 = vpop.f32.mrb[0].mxu0
  %v344 = vadd.f32 0.0, %v343
  %v345 = vpop.f32.mrb[0].mxu0
  %346 = vmatprep.mubr.f32.mxu0 0.0
  %347 = vmatmul.mubr.f32.gmra.mrb[0].mxu0 %v133
  %v348 = vpop.f32.mrb[0].mxu0
  %v349 = vadd.f32 0.0, %v348
  %v350 = vpop.f32.mrb[0].mxu0
  %351 = vmatprep.mubr.f32.mxu0 0.0
  %352 = vmatmul.mubr.f32.gmra.mrb[0].mxu0 %v136
  %v353 = vpop.f32.mrb[0].mxu0
  %v354 = vadd.f32 0.0, %v353
  %v355 = vpop.f32.mrb[0].mxu0
  %356 = vmatprep.mubr.f32.mxu0 0.0
  %357 = vmatmul.mubr.f32.gmra.mrb[0].mxu0 %v139
  %v358 = vpop.f32.mrb[0].mxu0
  %v359 = vadd.f32 0.0, %v358
  %v360 = vpop.f32.mrb[0].mxu0
  %361 = vmatprep.mubr.f32.mxu0 0.0
  %362 = vmatmul.mubr.f32.gmra.mrb[0].mxu0 %v142
  %v363 = vpop.f32.mrb[0].mxu0
  %v364 = vadd.f32 0.0, %v363
  %v365 = vpop.f32.mrb[0].mxu0
  %366 = vmatprep.mubr.f32.mxu0 0.0
  %367 = vmatmul.mubr.f32.gmra.mrb[0].mxu0 %v145
  %v368 = vpop.f32.mrb[0].mxu0
  %v369 = vadd.f32 0.0, %v368
  %v370 = vpop.f32.mrb[0].mxu0
  %371 = vdwg.mxu0
  %v372 = vld [vmem:[%s2] sm:$0xff]
  %v373 = vld [vmem:[%s2 + $0x8] sm:$0xff]
  %v374 = vld [vmem:[%s2 + $0x10] sm:$0xff]
  %v375 = vld [vmem:[%s2 + $0x18] sm:$0xff]
  %v376 = vld [vmem:[%s2 + $0x20] sm:$0xff]
  %v377 = vld [vmem:[%s2 + $0x28] sm:$0xff]
  %v378 = vld [vmem:[%s2 + $0x30] sm:$0xff]
  %v379 = vld [vmem:[%s2 + $0x38] sm:$0xff]
  %v380 = vld [vmem:[%s2 + $0x40] sm:$0xff]
  %v381 = vld [vmem:[%s2 + $0x48] sm:$0xff]
  %v382 = vld [vmem:[%s2 + $0x50] sm:$0xff]
  %v383 = vld [vmem:[%s2 + $0x58] sm:$0xff]
  %v384 = vld [vmem:[%s2 + $0x60] sm:$0xff]
  %v385 = vld [vmem:[%s2 + $0x68] sm:$0xff]
  %v386 = vld [vmem:[%s2 + $0x70] sm:$0xff]
  %v387 = vld [vmem:[%s2 + $0x78] sm:$0xff]
  %v388 = vld [vmem:[%s2 + $0x80] sm:$0xff]
  %v389 = vld [vmem:[%s2 + $0x88] sm:$0xff]
  %v390 = vld [vmem:[%s2 + $0x90] sm:$0xff]
  %v391 = vld [vmem:[%s2 + $0x98] sm:$0xff]
  %v392 = vld [vmem:[%s2 + $0xa0] sm:$0xff]
  %v393 = vld [vmem:[%s2 + $0xa8] sm:$0xff]
  %v394 = vld [vmem:[%s2 + $0xb0] sm:$0xff]
  %v395 = vld [vmem:[%s2 + $0xb8] sm:$0xff]
  %v396 = vld [vmem:[%s2 + $0xc0] sm:$0xff]
  %v397 = vld [vmem:[%s2 + $0xc8] sm:$0xff]
  %v398 = vld [vmem:[%s2 + $0xd0] sm:$0xff]
  %v399 = vld [vmem:[%s2 + $0xd8] sm:$0xff]
  %v400 = vld [vmem:[%s2 + $0xe0] sm:$0xff]
  %v401 = vld [vmem:[%s2 + $0xe8] sm:$0xff]
  %v402 = vld [vmem:[%s2 + $0xf0] sm:$0xff]
  %v403 = vld [vmem:[%s2 + $0xf8] sm:$0xff]
  %405 = vset.pattern.permute.xlu0 0
  %406 = vperm.xlu0 %405, %v372
  %v407 = vpop.permute.xlu0 %406
  %410 = vset.pattern.permute.xlu0 0
  %411 = vperm.xlu0 %410, %v373
  %v412 = vpop.permute.xlu0 %411
  %415 = vset.pattern.permute.xlu0 0
  %416 = vperm.xlu0 %415, %v374
  %v417 = vpop.permute.xlu0 %416
  %420 = vset.pattern.permute.xlu0 0
  %421 = vperm.xlu0 %420, %v375
  %v422 = vpop.permute.xlu0 %421
  %425 = vset.pattern.permute.xlu0 0
  %426 = vperm.xlu0 %425, %v376
  %v427 = vpop.permute.xlu0 %426
  %430 = vset.pattern.permute.xlu0 0
  %431 = vperm.xlu0 %430, %v377
  %v432 = vpop.permute.xlu0 %431
  %435 = vset.pattern.permute.xlu0 0
  %436 = vperm.xlu0 %435, %v378
  %v437 = vpop.permute.xlu0 %436
  %440 = vset.pattern.permute.xlu0 0
  %441 = vperm.xlu0 %440, %v379
  %v442 = vpop.permute.xlu0 %441
  %445 = vset.pattern.permute.xlu0 0
  %446 = vperm.xlu0 %445, %v380
  %v447 = vpop.permute.xlu0 %446
  %450 = vset.pattern.permute.xlu0 0
  %451 = vperm.xlu0 %450, %v381
  %v452 = vpop.permute.xlu0 %451
  %455 = vset.pattern.permute.xlu0 0
  %456 = vperm.xlu0 %455, %v382
  %v457 = vpop.permute.xlu0 %456
  %460 = vset.pattern.permute.xlu0 0
  %461 = vperm.xlu0 %460, %v383
  %v462 = vpop.permute.xlu0 %461
  %465 = vset.pattern.permute.xlu0 0
  %466 = vperm.xlu0 %465, %v384
  %v467 = vpop.permute.xlu0 %466
  %470 = vset.pattern.permute.xlu0 0
  %471 = vperm.xlu0 %470, %v385
  %v472 = vpop.permute.xlu0 %471
  %475 = vset.pattern.permute.xlu0 0
  %476 = vperm.xlu0 %475, %v386
  %v477 = vpop.permute.xlu0 %476
  %480 = vset.pattern.permute.xlu0 0
  %481 = vperm.xlu0 %480, %v387
  %v482 = vpop.permute.xlu0 %481
  %485 = vset.pattern.permute.xlu0 0
  %486 = vperm.xlu0 %485, %v388
  %v487 = vpop.permute.xlu0 %486
  %490 = vset.pattern.permute.xlu0 0
  %491 = vperm.xlu0 %490, %v389
  %v492 = vpop.permute.xlu0 %491
  %495 = vset.pattern.permute.xlu0 0
  %496 = vperm.xlu0 %495, %v390
  %v497 = vpop.permute.xlu0 %496
  %500 = vset.pattern.permute.xlu0 0
  %501 = vperm.xlu0 %500, %v391
  %v502 = vpop.permute.xlu0 %501
  %505 = vset.pattern.permute.xlu0 0
  %506 = vperm.xlu0 %505, %v392
  %v507 = vpop.permute.xlu0 %506
  %510 = vset.pattern.permute.xlu0 0
  %511 = vperm.xlu0 %510, %v393
  %v512 = vpop.permute.xlu0 %511
  %515 = vset.pattern.permute.xlu0 0
  %516 = vperm.xlu0 %515, %v394
  %v517 = vpop.permute.xlu0 %516
  %520 = vset.pattern.permute.xlu0 0
  %521 = vperm.xlu0 %520, %v395
  %v522 = vpop.permute.xlu0 %521
  %525 = vset.pattern.permute.xlu0 0
  %526 = vperm.xlu0 %525, %v396
  %v527 = vpop.permute.xlu0 %526
  %530 = vset.pattern.permute.xlu0 0
  %531 = vperm.xlu0 %530, %v397
  %v532 = vpop.permute.xlu0 %531
  %535 = vset.pattern.permute.xlu0 0
  %536 = vperm.xlu0 %535, %v398
  %v537 = vpop.permute.xlu0 %536
  %540 = vset.pattern.permute.xlu0 0
  %541 = vperm.xlu0 %540, %v399
  %v542 = vpop.permute.xlu0 %541
  %545 = vset.pattern.permute.xlu0 0
  %546 = vperm.xlu0 %545, %v400
  %v547 = vpop.permute.xlu0 %546
  %550 = vset.pattern.permute.xlu0 0
  %551 = vperm.xlu0 %550, %v401
  %v552 = vpop.permute.xlu0 %551
  %555 = vset.pattern.permute.xlu0 0
  %556 = vperm.xlu0 %555, %v402
  %v557 = vpop.permute.xlu0 %556
  %560 = vset.pattern.permute.xlu0 0
  %561 = vperm.xlu0 %560, %v403
  %v562 = vpop.permute.xlu0 %561
  %v564 = vsub.f32 %v407, %v214
  %v565 = vsub.f32 %v412, %v219
  %v566 = vsub.f32 %v417, %v224
  %v567 = vsub.f32 %v422, %v229
  %v568 = vsub.f32 %v427, %v234
  %v569 = vsub.f32 %v432, %v239
  %v570 = vsub.f32 %v437, %v244
  %v571 = vsub.f32 %v442, %v249
  %v572 = vsub.f32 %v447, %v254
  %v573 = vsub.f32 %v452, %v259
  %v574 = vsub.f32 %v457, %v264
  %v575 = vsub.f32 %v462, %v269
  %v576 = vsub.f32 %v467, %v274
  %v577 = vsub.f32 %v472, %v279
  %v578 = vsub.f32 %v477, %v284
  %v579 = vsub.f32 %v482, %v289
  %v580 = vsub.f32 %v487, %v294
  %v581 = vsub.f32 %v492, %v299
  %v582 = vsub.f32 %v497, %v304
  %v583 = vsub.f32 %v502, %v309
  %v584 = vsub.f32 %v507, %v314
  %v585 = vsub.f32 %v512, %v319
  %v586 = vsub.f32 %v517, %v324
  %v587 = vsub.f32 %v522, %v329
  %v588 = vsub.f32 %v527, %v334
  %v589 = vsub.f32 %v532, %v339
  %v590 = vsub.f32 %v537, %v344
  %v591 = vsub.f32 %v542, %v349
  %v592 = vsub.f32 %v547, %v354
  %v593 = vsub.f32 %v552, %v359
  %v594 = vsub.f32 %v557, %v364
  %v595 = vsub.f32 %v562, %v369
  %v596 = vmin.f32 %v564, %v568
  %v597 = vmin.f32 %v565, %v569
  %v598 = vmin.f32 %v566, %v570
  %v599 = vmin.f32 %v567, %v571
  %v600 = vmin.f32 %v596, %v572
  %v601 = vmin.f32 %v597, %v573
  %v602 = vmin.f32 %v598, %v574
  %v603 = vmin.f32 %v599, %v575
  %v604 = vmin.f32 %v600, %v576
  %v605 = vmin.f32 %v601, %v577
  %v606 = vmin.f32 %v602, %v578
  %v607 = vmin.f32 %v603, %v579
  %v608 = vmin.f32 %v604, %v580
  %v609 = vmin.f32 %v605, %v581
  %v610 = vmin.f32 %v606, %v582
  %v611 = vmin.f32 %v607, %v583
  %v612 = vmin.f32 %v608, %v584
  %v613 = vmin.f32 %v609, %v585
  %v614 = vmin.f32 %v610, %v586
  %v615 = vmin.f32 %v611, %v587
  %v616 = vmin.f32 %v612, %v588
  %v617 = vmin.f32 %v613, %v589
  %v618 = vmin.f32 %v614, %v590
  %v619 = vmin.f32 %v615, %v591
  %v620 = vmin.f32 %v616, %v592
  %v621 = vmin.f32 %v617, %v593
  %v622 = vmin.f32 %v618, %v594
  %v623 = vmin.f32 %v619, %v595
  %v624 = vmin.f32 %v620, %v621
  %v625 = vmin.f32 %v622, %v623
  %v626 = vmin.f32 %v624, %v625
  %v627 = vrot.slane %v626, 4
  %v628 = vmin.f32 %v626, %v627
  %v629 = vrot.slane %v628, 2
  %v630 = vmin.f32 %v628, %v629
  %v631 = vrot.slane %v630, 1
  %v632 = vmin.f32 %v630, %v631
  %v633 = vlaneseq
  %v634 = vshrl.u32 %v633, 7
  %v635 = vadd.s32 %v634, 8
  %v636 = vadd.s32 %v634, 16
  %v637 = vadd.s32 %v634, 24
  %v638 = vadd.s32 %v634, 32
  %v639 = vadd.s32 %v634, 40
  %v640 = vadd.s32 %v634, 48
  %v641 = vadd.s32 %v634, 56
  %v642 = vadd.s32 %v634, 64
  %v643 = vadd.s32 %v634, 72
  %v644 = vadd.s32 %v634, 80
  %v645 = vadd.s32 %v634, 88
  %v646 = vadd.s32 %v634, 96
  %v647 = vadd.s32 %v634, 104
  %v648 = vadd.s32 %v634, 112
  %v649 = vadd.s32 %v634, 120
  %v650 = vadd.s32 %v634, 128
  %v651 = vadd.s32 %v634, 136
  %v652 = vadd.s32 %v634, 144
  %v653 = vadd.s32 %v634, 152
  %v654 = vadd.s32 %v634, 160
  %v655 = vadd.s32 %v634, 168
  %v656 = vadd.s32 %v634, 176
  %v657 = vadd.s32 %v634, 184
  %v658 = vadd.s32 %v634, 192
  %v659 = vadd.s32 %v634, 200
  %v660 = vadd.s32 %v634, 208
  %v661 = vadd.s32 %v634, 216
  %v662 = vadd.s32 %v634, 224
  %v663 = vadd.s32 %v634, 232
  %v664 = vadd.s32 %v634, 240
  %v665 = vadd.s32 %v634, 248
  %vm666 = vcmp.eq.f32.partialorder %v564, %v632
  %vm667 = vcmp.eq.f32.partialorder %v565, %v632
  %vm668 = vcmp.eq.f32.partialorder %v566, %v632
  %vm669 = vcmp.eq.f32.partialorder %v567, %v632
  %vm670 = vcmp.eq.f32.partialorder %v568, %v632
  %vm671 = vcmp.eq.f32.partialorder %v569, %v632
  %vm672 = vcmp.eq.f32.partialorder %v570, %v632
  %vm673 = vcmp.eq.f32.partialorder %v571, %v632
  %vm674 = vcmp.eq.f32.partialorder %v572, %v632
  %vm675 = vcmp.eq.f32.partialorder %v573, %v632
  %vm676 = vcmp.eq.f32.partialorder %v574, %v632
  %vm677 = vcmp.eq.f32.partialorder %v575, %v632
  %vm678 = vcmp.eq.f32.partialorder %v576, %v632
  %vm679 = vcmp.eq.f32.partialorder %v577, %v632
  %vm680 = vcmp.eq.f32.partialorder %v578, %v632
  %vm681 = vcmp.eq.f32.partialorder %v579, %v632
  %vm682 = vcmp.eq.f32.partialorder %v580, %v632
  %vm683 = vcmp.eq.f32.partialorder %v581, %v632
  %vm684 = vcmp.eq.f32.partialorder %v582, %v632
  %vm685 = vcmp.eq.f32.partialorder %v583, %v632
  %vm686 = vcmp.eq.f32.partialorder %v584, %v632
  %vm687 = vcmp.eq.f32.partialorder %v585, %v632
  %vm688 = vcmp.eq.f32.partialorder %v586, %v632
  %vm689 = vcmp.eq.f32.partialorder %v587, %v632
  %vm690 = vcmp.eq.f32.partialorder %v588, %v632
  %vm691 = vcmp.eq.f32.partialorder %v589, %v632
  %vm692 = vcmp.eq.f32.partialorder %v590, %v632
  %vm693 = vcmp.eq.f32.partialorder %v591, %v632
  %vm694 = vcmp.eq.f32.partialorder %v592, %v632
  %vm695 = vcmp.eq.f32.partialorder %v593, %v632
  %vm696 = vcmp.eq.f32.partialorder %v594, %v632
  %vm697 = vcmp.eq.f32.partialorder %v595, %v632
  %v698 = vsel %vm666, %v634, 256
  %v699 = vsel %vm667, %v635, 256
  %v700 = vsel %vm668, %v636, 256
  %v701 = vsel %vm669, %v637, 256
  %v702 = vsel %vm670, %v638, 256
  %v703 = vsel %vm671, %v639, 256
  %v704 = vsel %vm672, %v640, 256
  %v705 = vsel %vm673, %v641, 256
  %v706 = vsel %vm674, %v642, 256
  %v707 = vsel %vm675, %v643, 256
  %v708 = vsel %vm676, %v644, 256
  %v709 = vsel %vm677, %v645, 256
  %v710 = vsel %vm678, %v646, 256
  %v711 = vsel %vm679, %v647, 256
  %v712 = vsel %vm680, %v648, 256
  %v713 = vsel %vm681, %v649, 256
  %v714 = vsel %vm682, %v650, 256
  %v715 = vsel %vm683, %v651, 256
  %v716 = vsel %vm684, %v652, 256
  %v717 = vsel %vm685, %v653, 256
  %v718 = vsel %vm686, %v654, 256
  %v719 = vsel %vm687, %v655, 256
  %v720 = vsel %vm688, %v656, 256
  %v721 = vsel %vm689, %v657, 256
  %v722 = vsel %vm690, %v658, 256
  %v723 = vsel %vm691, %v659, 256
  %v724 = vsel %vm692, %v660, 256
  %v725 = vsel %vm693, %v661, 256
  %v726 = vsel %vm694, %v662, 256
  %v727 = vsel %vm695, %v663, 256
  %v728 = vsel %vm696, %v664, 256
  %v729 = vsel %vm697, %v665, 256
  %vm730 = vcmp.lt.s32.totalorder %v698, %v702
  %v731 = vsel %vm730, %v698, %v702
  %vm732 = vcmp.lt.s32.totalorder %v699, %v703
  %v733 = vsel %vm732, %v699, %v703
  %vm734 = vcmp.lt.s32.totalorder %v700, %v704
  %v735 = vsel %vm734, %v700, %v704
  %vm736 = vcmp.lt.s32.totalorder %v701, %v705
  %v737 = vsel %vm736, %v701, %v705
  %vm738 = vcmp.lt.s32.totalorder %v731, %v706
  %v739 = vsel %vm738, %v731, %v706
  %vm740 = vcmp.lt.s32.totalorder %v733, %v707
  %v741 = vsel %vm740, %v733, %v707
  %vm742 = vcmp.lt.s32.totalorder %v735, %v708
  %v743 = vsel %vm742, %v735, %v708
  %vm744 = vcmp.lt.s32.totalorder %v737, %v709
  %v745 = vsel %vm744, %v737, %v709
  %vm746 = vcmp.lt.s32.totalorder %v739, %v710
  %v747 = vsel %vm746, %v739, %v710
  %vm748 = vcmp.lt.s32.totalorder %v741, %v711
  %v749 = vsel %vm748, %v741, %v711
  %vm750 = vcmp.lt.s32.totalorder %v743, %v712
  %v751 = vsel %vm750, %v743, %v712
  %vm752 = vcmp.lt.s32.totalorder %v745, %v713
  %v753 = vsel %vm752, %v745, %v713
  %vm754 = vcmp.lt.s32.totalorder %v747, %v714
  %v755 = vsel %vm754, %v747, %v714
  %vm756 = vcmp.lt.s32.totalorder %v749, %v715
  %v757 = vsel %vm756, %v749, %v715
  %vm758 = vcmp.lt.s32.totalorder %v751, %v716
  %v759 = vsel %vm758, %v751, %v716
  %vm760 = vcmp.lt.s32.totalorder %v753, %v717
  %v761 = vsel %vm760, %v753, %v717
  %vm762 = vcmp.lt.s32.totalorder %v755, %v718
  %v763 = vsel %vm762, %v755, %v718
  %vm764 = vcmp.lt.s32.totalorder %v757, %v719
  %v765 = vsel %vm764, %v757, %v719
  %vm766 = vcmp.lt.s32.totalorder %v759, %v720
  %v767 = vsel %vm766, %v759, %v720
  %vm768 = vcmp.lt.s32.totalorder %v761, %v721
  %v769 = vsel %vm768, %v761, %v721
  %vm770 = vcmp.lt.s32.totalorder %v763, %v722
  %v771 = vsel %vm770, %v763, %v722
  %vm772 = vcmp.lt.s32.totalorder %v765, %v723
  %v773 = vsel %vm772, %v765, %v723
  %vm774 = vcmp.lt.s32.totalorder %v767, %v724
  %v775 = vsel %vm774, %v767, %v724
  %vm776 = vcmp.lt.s32.totalorder %v769, %v725
  %v777 = vsel %vm776, %v769, %v725
  %vm778 = vcmp.lt.s32.totalorder %v771, %v726
  %v779 = vsel %vm778, %v771, %v726
  %vm780 = vcmp.lt.s32.totalorder %v773, %v727
  %v781 = vsel %vm780, %v773, %v727
  %vm782 = vcmp.lt.s32.totalorder %v775, %v728
  %v783 = vsel %vm782, %v775, %v728
  %vm784 = vcmp.lt.s32.totalorder %v777, %v729
  %v785 = vsel %vm784, %v777, %v729
  %vm786 = vcmp.lt.s32.totalorder %v779, %v781
  %v787 = vsel %vm786, %v779, %v781
  %vm788 = vcmp.lt.s32.totalorder %v783, %v785
  %v789 = vsel %vm788, %v783, %v785
  %vm790 = vcmp.lt.s32.totalorder %v787, %v789
  %v791 = vsel %vm790, %v787, %v789
  %v792 = vrot.slane %v791, 4
  %vm793 = vcmp.lt.s32.totalorder %v791, %v792
  %v794 = vsel %vm793, %v791, %v792
  %v795 = vrot.slane %v794, 2
  %vm796 = vcmp.lt.s32.totalorder %v794, %v795
  %v797 = vsel %vm796, %v794, %v795
  %v798 = vrot.slane %v797, 1
  %vm799 = vcmp.lt.s32.totalorder %v797, %v798
  %v800 = vsel %vm799, %v797, %v798
  %801 = vst [vmem:[%s3] sm:$0x1] %v800
  // Predicated region
  $region14: #{vector_quantizer_forward.1} parent=0 // pred_check
    _
  $region15: #{vector_quantizer_forward.1} parent=0 // pred_check_branch
    %803 = sbr.rel (0) target = $region17
  $region16: #{vector_quantizer_forward.1} parent=0 // pred_region
    _
  $region17: #{vector_quantizer_forward.1} parent=0 // pred_fallthru
    _
  // Predicated region
  $region18: #{vector_quantizer_forward.1} parent=0 // pred_check
    _
  $region19: #{vector_quantizer_forward.1} parent=0 // pred_check_branch
    %805 = sbr.rel (0) target = $region21
  $region20: #{vector_quantizer_forward.1} parent=0 // pred_region
    _
  $region21: #{vector_quantizer_forward.1} parent=0 // pred_fallthru
    _

</llo_original>
